<compile_context>
chip_gen: v6e
topology: v6e:2x2x1
jax: 0.10.0
libtpu: 0.0.40
codegen_flags: <defaults>
</compile_context>

<pallas_src>
import functools

import jax
import jax.numpy as jnp
from jax.experimental import pallas as pl
from jax.experimental.pallas import tpu as pltpu

IGNORE_INDEX = -100


def _round_up(x: int, m: int) -> int:
    return ((x + m - 1) // m) * m


def _ce_kernel(logits_ref, labels_ref, out_ref, m_sc, s_sc, lbl_sc,
               *, n_rows, vocab, ragged_v):
    """Grid (row_block i, vocab_block j): online LSE over j, finalize at last j."""
    i = pl.program_id(0)
    j = pl.program_id(1)
    nj = pl.num_programs(1)
    tile_n, tile_v = logits_ref.shape

    @pl.when(j == 0)
    def _():
        m_sc[...] = jnp.full_like(m_sc, -jnp.inf)
        s_sc[...] = jnp.zeros_like(s_sc)
        lbl_sc[...] = jnp.zeros_like(lbl_sc)

    x = logits_ref[...]                      # native dtype (bf16 or f32), (tile_n, tile_v)
    lbl = labels_ref[...]                    # (tile_n, 1) int32 (resident across j)

    col = j * tile_v + jax.lax.broadcasted_iota(jnp.int32, (tile_n, tile_v), 1)

    # Ragged last vocab chunk: mask out-of-range columns (static skip when V % tile_v == 0).
    if ragged_v:
        x_for_lse = jnp.where(col < vocab, x, -jnp.inf)
    else:
        x_for_lse = x

    # First pass in native dtype: chunk max + fused label-logit gather
    # (labels are always < V, so out-of-range columns never match).
    chunk_max = jnp.max(x_for_lse, axis=-1, keepdims=True).astype(jnp.float32)
    picked = jnp.where(col == lbl, x, 0)                     # at most one nonzero per row
    lbl_contrib = jnp.sum(picked, axis=-1, keepdims=True).astype(jnp.float32)

    # Online logsumexp update; only the exp input is upcast to f32 (chunk-sized temp).
    m_prev = m_sc[...]
    m_new = jnp.maximum(m_prev, chunk_max)
    e = jnp.exp(x_for_lse.astype(jnp.float32) - m_new)       # masked cols -> exp(-inf) = 0
    chunk_sum = jnp.sum(e, axis=-1, keepdims=True)
    alpha = jnp.exp(m_prev - m_new)
    s_sc[...] = alpha * s_sc[...] + chunk_sum
    lbl_sc[...] = lbl_sc[...] + lbl_contrib
    m_sc[...] = m_new

    @pl.when(j == nj - 1)
    def _():
        # per-row nll = logsumexp - label_logit
        per_row = (m_sc[...] + jnp.log(s_sc[...])) - lbl_sc[...]      # (tile_n, 1) f32
        row = i * tile_n + jax.lax.broadcasted_iota(jnp.int32, (tile_n, 1), 0)
        valid = jnp.logical_and(lbl != IGNORE_INDEX, row < n_rows)
        # NOTE: keep these as selects (not mask-multiply): garbage tail rows can
        # legally hold NaN/Inf and must not poison the block sums.
        block_sum = jnp.sum(jnp.where(valid, per_row, 0.0))
        block_cnt = jnp.sum(jnp.where(valid, 1.0, 0.0))
        lane = jax.lax.broadcasted_iota(jnp.int32, out_ref.shape, 2)   # (1, 1, 128)
        out_ref[...] = jnp.where(lane == 0, block_sum,
                                 jnp.where(lane == 1, block_cnt, 0.0))


def _cross_entropy_pallas(logits_2d: jax.Array, labels_1d: jax.Array,
                          tile_n=None, tile_v=None) -> jax.Array:
    """Mean cross-entropy over rows of logits_2d [N, V] with labels [N]."""
    n, v = logits_2d.shape
    itemsize = jnp.dtype(logits_2d.dtype).itemsize
    pack = 32 // itemsize                   # sublane packing: 8 f32, 16 bf16

    # Generation-aware VMEM capacity (64 MiB on v7x, 128 MiB on v5e/v6e).
    try:
        vmem_cap = int(pltpu.get_tpu_info().vmem_capacity_bytes)
    except Exception:
        vmem_cap = 64 << 20                 # conservative fallback (v7x)

    # Vocab chunk: caps the chunk-sized f32 temporaries; full-dim if V is small.
    if tile_v is None:
        tile_v = v if v <= 2048 else 2048
    if tile_v >= v:
        tile_v = v                          # full-dim block (exempt from the 128 rule)
    else:
        tile_v = max(128, (int(tile_v) // 128) * 128)
    num_v_blocks = pl.cdiv(v, tile_v)
    ragged_v = (tile_v != v) and (v % tile_v != 0)

    if tile_n is None:
        # Budget: 2 native-dtype DMA buffers + ~3 chunk-sized f32 temps per element,
        # all inside ~70% of physical VMEM (rest: labels, scratch, outputs, headroom).
        budget = int(vmem_cap * 0.70)
        per_elem = 2 * itemsize + 3 * 4
        tile_n = budget // max(1, tile_v * per_elem)
        tile_n = min(tile_n, 2048)
    tile_n = max(pack, (int(tile_n) // pack) * pack)
    tile_n = min(tile_n, _round_up(n, pack))      # don't over-allocate for tiny N

    num_row_blocks = pl.cdiv(n, tile_n)
    labels_2d = labels_1d.reshape(n, 1).astype(jnp.int32)

    # VMEM accounting: double-buffered blocks + chunk-sized f32 temps + scratch.
    logits_block = tile_n * tile_v * itemsize
    labels_block = tile_n * 128 * 4               # lane-padded int32
    out_block = 8 * 128 * 4
    scratch_bytes = 3 * tile_n * 128 * 4          # lane-padded f32 accumulators
    temp_bytes = 3 * tile_n * tile_v * 4          # in-kernel f32 elementwise temps
    vmem_needed = (2 * (logits_block + labels_block + out_block)
                   + scratch_bytes + temp_bytes)
    vmem_limit = int(min(max(vmem_needed + (4 << 20), 32 << 20),
                         vmem_cap - (2 << 20)))

    kernel = functools.partial(_ce_kernel, n_rows=n, vocab=v, ragged_v=ragged_v)
    out = pl.pallas_call(
        kernel,
        out_shape=jax.ShapeDtypeStruct((num_row_blocks, 1, 128), jnp.float32),
        grid_spec=pltpu.PrefetchScalarGridSpec(
            num_scalar_prefetch=0,
            grid=(num_row_blocks, num_v_blocks),
            in_specs=[
                pl.BlockSpec((tile_n, tile_v), lambda i, j: (i, j)),
                # Same block index across the vocab axis -> labels tile stays resident.
                pl.BlockSpec((tile_n, 1), lambda i, j: (i, 0)),
            ],
            # Output block resident across the vocab (reduction) axis; written at last j.
            out_specs=pl.BlockSpec((1, 1, 128), lambda i, j: (i, 0, 0)),
            scratch_shapes=[pltpu.VMEM((tile_n, 1), jnp.float32),   # running max m
                            pltpu.VMEM((tile_n, 1), jnp.float32),   # running sum_exp
                            pltpu.VMEM((tile_n, 1), jnp.float32)],  # label logit
        ),
        compiler_params=pltpu.CompilerParams(
            dimension_semantics=("parallel", "arbitrary"),
            vmem_limit_bytes=vmem_limit,
        ),
    )(logits_2d, labels_2d)

    total = jnp.sum(out[:, 0, 0])
    count = jnp.sum(out[:, 0, 1].astype(jnp.int32)).astype(jnp.float32)
    return (total / count).astype(jnp.float32)


def lm_head_loss(lm_logits: jax.Array, labels: jax.Array,
                 shift_labels: bool = False, tile_n=None, tile_v=None) -> jax.Array:
    """JAX/Pallas equivalent of LMHeadLoss.forward."""
    if shift_labels:
        lm_logits = lm_logits[..., :-1, :]
        labels = labels[..., 1:]
    v = lm_logits.shape[-1]
    logits_2d = lm_logits.reshape(-1, v)          # keep native dtype (bf16 streams at half HBM)
    labels_1d = labels.reshape(-1)
    return _cross_entropy_pallas(logits_2d, labels_1d, tile_n=tile_n, tile_v=tile_v)


def _ref_loss(logits, labels, shift_labels=False):
    """Plain-JAX reference (mean CE with ignore_index=-100)."""
    if shift_labels:
        logits = logits[..., :-1, :]
        labels = labels[..., 1:]
    v = logits.shape[-1]
    lg = logits.reshape(-1, v).astype(jnp.float32)
    lb = labels.reshape(-1)
    valid = lb != IGNORE_INDEX
    lp = jax.nn.log_softmax(lg, axis=-1)
    safe = jnp.where(valid, lb, 0)
    nll = -jnp.take_along_axis(lp, safe[:, None], axis=-1)[:, 0]
    return jnp.sum(jnp.where(valid, nll, 0.0)) / jnp.sum(valid)


if __name__ == "__main__":
    key = jax.random.PRNGKey(0)
    k1, k2, k3 = jax.random.split(key, 3)

    B, T, V = 2, 8, 256   # small shapes consistent with an LM head
    lm_logits = jax.random.normal(k1, (B, T, V), dtype=jnp.float32)
    labels = jax.random.randint(k2, (B, T), 0, V, dtype=jnp.int32)

    # 1) Basic path (auto tile, single vocab block).
    loss = jax.block_until_ready(lm_head_loss(lm_logits, labels))
    ref = _ref_loss(lm_logits, labels)
    assert jnp.allclose(loss, ref, atol=1e-5, rtol=1e-5), (loss, ref)

    # 2) shift_labels=True with some ignore_index labels (N not a tile multiple).
    labels_ig = labels.at[0, 2].set(IGNORE_INDEX).at[1, 5].set(IGNORE_INDEX)
    loss_s = jax.block_until_ready(
        lm_head_loss(lm_logits, labels_ig, shift_labels=True))
    ref_s = _ref_loss(lm_logits, labels_ig, shift_labels=True)
    assert jnp.allclose(loss_s, ref_s, atol=1e-5, rtol=1e-5), (loss_s, ref_s)

    # 3) Forced small tiles: ragged row tail (N=14, tile_n=8) AND ragged vocab
    #    chunking (V=200, tile_v=128 -> 2 chunks, second one partially OOB).
    T3, V3 = 7, 200
    logits3 = jax.random.normal(k3, (B, T3, V3), dtype=jnp.float32)
    labels3 = jax.random.randint(k2, (B, T3), 0, V3, dtype=jnp.int32)
    loss3 = jax.block_until_ready(lm_head_loss(logits3, labels3, tile_n=8, tile_v=128))
    ref3 = _ref_loss(logits3, labels3)
    assert jnp.allclose(loss3, ref3, atol=1e-5, rtol=1e-5), (loss3, ref3)

    # 4) bf16 streaming path (no pre-cast in the wrapper; chunk-wise upcast in VMEM).
    lm_bf16 = lm_logits.astype(jnp.bfloat16)
    loss_bf = jax.block_until_ready(lm_head_loss(lm_bf16, labels))
    ref_bf = _ref_loss(lm_bf16, labels)
    assert jnp.allclose(loss_bf, ref_bf, atol=1e-3, rtol=1e-3), (loss_bf, ref_bf)

    print("KERNEL_OK")
</pallas_src>

<mosaic_0001>
module attributes {stable_mosaic.version = 11 : i64} {
  func.func @_ce_kernel(%arg0: i32, %arg1: i32, %arg2: memref<16x256xf32, #tpu.memory_space<vmem>>, %arg3: memref<16x1xi32, #tpu.memory_space<vmem>>, %arg4: memref<1x1x128xf32, #tpu.memory_space<vmem>>, %arg5: memref<16x1xf32, #tpu.memory_space<vmem>>, %arg6: memref<16x1xf32, #tpu.memory_space<vmem>>, %arg7: memref<16x1xf32, #tpu.memory_space<vmem>>) attributes {dimension_semantics = [#tpu.dimension_semantics<parallel>, #tpu.dimension_semantics<arbitrary>], iteration_bounds = array<i64: 1, 1>, scalar_prefetch = 0 : i64, scratch_operands = 3 : i64, tpu.core_type = #tpu.core_type<tc>, window_params = [{transform_indices = @transform_0, window_bounds = array<i64: 16, 256>}, {transform_indices = @transform_1, window_bounds = array<i64: 16, 1>}, {transform_indices = @transform_2, window_bounds = array<i64: 1, 1, 128>}]} {
    %c0_i32 = arith.constant 0 : i32
    %0 = arith.cmpi eq, %arg1, %c0_i32 : i32
    %1 = arith.extui %0 : i1 to i32
    %c0_i32_0 = arith.constant 0 : i32
    %2 = arith.cmpi ne, %1, %c0_i32_0 : i32
    scf.if %2 {
      %cst_21 = arith.constant 0xFF800000 : f32
      %38 = vector.broadcast %cst_21 : f32 to vector<16x1xf32>
      %c0_22 = arith.constant 0 : index
      %c0_23 = arith.constant 0 : index
      %39 = vector.load %arg5[%c0_22, %c0_23] : memref<16x1xf32, #tpu.memory_space<vmem>>, vector<16x1xf32>
      tpu.vector_store %arg5[%c0_22, %c0_23], %38 {strides = array<i32>} : memref<16x1xf32, #tpu.memory_space<vmem>>, vector<16x1xf32>,
      %cst_24 = arith.constant 0.000000e+00 : f32
      %40 = vector.broadcast %cst_24 : f32 to vector<16x1xf32>
      %c0_25 = arith.constant 0 : index
      %c0_26 = arith.constant 0 : index
      %41 = vector.load %arg6[%c0_25, %c0_26] : memref<16x1xf32, #tpu.memory_space<vmem>>, vector<16x1xf32>
      tpu.vector_store %arg6[%c0_25, %c0_26], %40 {strides = array<i32>} : memref<16x1xf32, #tpu.memory_space<vmem>>, vector<16x1xf32>,
      %cst_27 = arith.constant 0.000000e+00 : f32
      %42 = vector.broadcast %cst_27 : f32 to vector<16x1xf32>
      %c0_28 = arith.constant 0 : index
      %c0_29 = arith.constant 0 : index
      %43 = vector.load %arg7[%c0_28, %c0_29] : memref<16x1xf32, #tpu.memory_space<vmem>>, vector<16x1xf32>
      tpu.vector_store %arg7[%c0_28, %c0_29], %42 {strides = array<i32>} : memref<16x1xf32, #tpu.memory_space<vmem>>, vector<16x1xf32>,
    } else {
    }
    %c0 = arith.constant 0 : index
    %c0_1 = arith.constant 0 : index
    %3 = vector.load %arg2[%c0, %c0_1] : memref<16x256xf32, #tpu.memory_space<vmem>>, vector<16x256xf32>
    %c0_2 = arith.constant 0 : index
    %c0_3 = arith.constant 0 : index
    %4 = vector.load %arg3[%c0_2, %c0_3] : memref<16x1xi32, #tpu.memory_space<vmem>>, vector<16x1xi32>
    %c256_i32 = arith.constant 256 : i32
    %5 = arith.muli %arg1, %c256_i32 : i32
    %6 = tpu.iota {dimensions = array<i32: 1>} : vector<16x256xi32>
    %7 = vector.broadcast %5 : i32 to vector<16x256xi32>
    %8 = arith.addi %7, %6 : vector<16x256xi32>
    %cst = arith.constant dense<0xFF800000> : vector<16xf32>
    %9 = vector.multi_reduction <maximumf>, %3, %cst [1] : vector<16x256xf32> to vector<16xf32>
    %10 = vector.shape_cast %9 : vector<16xf32> to vector<16x1xf32>
    %11 = vector.broadcast %4 : vector<16x1xi32> to vector<16x256xi32>
    %12 = arith.cmpi eq, %8, %11 : vector<16x256xi32>
    %c0_i32_4 = arith.constant 0 : i32
    %13 = arith.sitofp %c0_i32_4 : i32 to f32
    %14 = vector.broadcast %13 : f32 to vector<16x256xf32>
    %15 = arith.select %12, %3, %14 : vector<16x256xi1>, vector<16x256xf32>
    %cst_5 = arith.constant dense<0.000000e+00> : vector<16xf32>
    %16 = vector.multi_reduction <add>, %15, %cst_5 [1] : vector<16x256xf32> to vector<16xf32>
    %17 = vector.shape_cast %16 : vector<16xf32> to vector<16x1xf32>
    %c0_6 = arith.constant 0 : index
    %c0_7 = arith.constant 0 : index
    %18 = vector.load %arg5[%c0_6, %c0_7] : memref<16x1xf32, #tpu.memory_space<vmem>>, vector<16x1xf32>
    %19 = arith.maximumf %18, %10 : vector<16x1xf32>
    %20 = vector.broadcast %19 : vector<16x1xf32> to vector<16x256xf32>
    %21 = arith.subf %3, %20 : vector<16x256xf32>
    %22 = math.exp %21 : vector<16x256xf32>
    %cst_8 = arith.constant dense<0.000000e+00> : vector<16xf32>
    %23 = vector.multi_reduction <add>, %22, %cst_8 [1] : vector<16x256xf32> to vector<16xf32>
    %24 = vector.shape_cast %23 : vector<16xf32> to vector<16x1xf32>
    %25 = arith.subf %18, %19 : vector<16x1xf32>
    %26 = math.exp %25 : vector<16x1xf32>
    %c0_9 = arith.constant 0 : index
    %c0_10 = arith.constant 0 : index
    %27 = vector.load %arg6[%c0_9, %c0_10] : memref<16x1xf32, #tpu.memory_space<vmem>>, vector<16x1xf32>
    %28 = arith.mulf %26, %27 : vector<16x1xf32>
    %29 = arith.addf %28, %24 : vector<16x1xf32>
    %c0_11 = arith.constant 0 : index
    %c0_12 = arith.constant 0 : index
    %30 = vector.load %arg6[%c0_11, %c0_12] : memref<16x1xf32, #tpu.memory_space<vmem>>, vector<16x1xf32>
    tpu.vector_store %arg6[%c0_11, %c0_12], %29 {strides = array<i32>} : memref<16x1xf32, #tpu.memory_space<vmem>>, vector<16x1xf32>,
    %c0_13 = arith.constant 0 : index
    %c0_14 = arith.constant 0 : index
    %31 = vector.load %arg7[%c0_13, %c0_14] : memref<16x1xf32, #tpu.memory_space<vmem>>, vector<16x1xf32>
    %32 = arith.addf %31, %17 : vector<16x1xf32>
    %c0_15 = arith.constant 0 : index
    %c0_16 = arith.constant 0 : index
    %33 = vector.load %arg7[%c0_15, %c0_16] : memref<16x1xf32, #tpu.memory_space<vmem>>, vector<16x1xf32>
    tpu.vector_store %arg7[%c0_15, %c0_16], %32 {strides = array<i32>} : memref<16x1xf32, #tpu.memory_space<vmem>>, vector<16x1xf32>,
    %c0_17 = arith.constant 0 : index
    %c0_18 = arith.constant 0 : index
    %34 = vector.load %arg5[%c0_17, %c0_18] : memref<16x1xf32, #tpu.memory_space<vmem>>, vector<16x1xf32>
    tpu.vector_store %arg5[%c0_17, %c0_18], %19 {strides = array<i32>} : memref<16x1xf32, #tpu.memory_space<vmem>>, vector<16x1xf32>,
    %c0_i32_19 = arith.constant 0 : i32
    %35 = arith.cmpi eq, %arg1, %c0_i32_19 : i32
    %36 = arith.extui %35 : i1 to i32
    %c0_i32_20 = arith.constant 0 : i32
    %37 = arith.cmpi ne, %36, %c0_i32_20 : i32
    scf.if %37 {
      %c0_21 = arith.constant 0 : index
      %c0_22 = arith.constant 0 : index
      %38 = vector.load %arg5[%c0_21, %c0_22] : memref<16x1xf32, #tpu.memory_space<vmem>>, vector<16x1xf32>
      %c0_23 = arith.constant 0 : index
      %c0_24 = arith.constant 0 : index
      %39 = vector.load %arg6[%c0_23, %c0_24] : memref<16x1xf32, #tpu.memory_space<vmem>>, vector<16x1xf32>
      %40 = math.log %39 : vector<16x1xf32>
      %41 = arith.addf %38, %40 : vector<16x1xf32>
      %c0_25 = arith.constant 0 : index
      %c0_26 = arith.constant 0 : index
      %42 = vector.load %arg7[%c0_25, %c0_26] : memref<16x1xf32, #tpu.memory_space<vmem>>, vector<16x1xf32>
      %43 = arith.subf %41, %42 : vector<16x1xf32>
      %c16_i32 = arith.constant 16 : i32
      %44 = arith.muli %arg0, %c16_i32 : i32
      %45 = tpu.iota {dimensions = array<i32: 0>} : vector<16x1xi32>
      %46 = vector.broadcast %44 : i32 to vector<16x1xi32>
      %47 = arith.addi %46, %45 : vector<16x1xi32>
      %c-100_i32 = arith.constant -100 : i32
      %48 = vector.broadcast %c-100_i32 : i32 to vector<16x1xi32>
      %49 = arith.cmpi ne, %4, %48 : vector<16x1xi32>
      %c16_i32_27 = arith.constant 16 : i32
      %50 = vector.broadcast %c16_i32_27 : i32 to vector<16x1xi32>
      %51 = arith.cmpi slt, %47, %50 : vector<16x1xi32>
      %52 = arith.andi %49, %51 : vector<16x1xi1>
      %cst_28 = arith.constant 0.000000e+00 : f32
      %53 = vector.broadcast %cst_28 : f32 to vector<16x1xf32>
      %54 = arith.select %52, %43, %53 : vector<16x1xi1>, vector<16x1xf32>
      %55 = vector.shape_cast %54 : vector<16x1xf32> to vector<1x16x1xf32>
      %cst_29 = arith.constant dense<0.000000e+00> : vector<1xf32>
      %56 = vector.multi_reduction <add>, %55, %cst_29 [1, 2] : vector<1x16x1xf32> to vector<1xf32>
      %57 = vector.shape_cast %56 : vector<1xf32> to vector<1x1x1xf32>
      %58 = vector.extract %57[0, 0, 0] : f32 from vector<1x1x1xf32>
      %cst_30 = arith.constant 1.000000e+00 : f32
      %cst_31 = arith.constant 0.000000e+00 : f32
      %59 = vector.broadcast %cst_30 : f32 to vector<16x1xf32>
      %60 = vector.broadcast %cst_31 : f32 to vector<16x1xf32>
      %61 = arith.select %52, %59, %60 : vector<16x1xi1>, vector<16x1xf32>
      %62 = vector.shape_cast %61 : vector<16x1xf32> to vector<1x16x1xf32>
      %cst_32 = arith.constant dense<0.000000e+00> : vector<1xf32>
      %63 = vector.multi_reduction <add>, %62, %cst_32 [1, 2] : vector<1x16x1xf32> to vector<1xf32>
      %64 = vector.shape_cast %63 : vector<1xf32> to vector<1x1x1xf32>
      %65 = vector.extract %64[0, 0, 0] : f32 from vector<1x1x1xf32>
      %66 = tpu.iota {dimensions = array<i32: 2>} : vector<1x1x128xi32>
      %c0_i32_33 = arith.constant 0 : i32
      %67 = vector.broadcast %c0_i32_33 : i32 to vector<1x1x128xi32>
      %68 = arith.cmpi eq, %66, %67 : vector<1x1x128xi32>
      %c1_i32 = arith.constant 1 : i32
      %69 = vector.broadcast %c1_i32 : i32 to vector<1x1x128xi32>
      %70 = arith.cmpi eq, %66, %69 : vector<1x1x128xi32>
      %cst_34 = arith.constant 0.000000e+00 : f32
      %71 = vector.broadcast %65 : f32 to vector<1x1x128xf32>
      %72 = vector.broadcast %cst_34 : f32 to vector<1x1x128xf32>
      %73 = arith.select %70, %71, %72 : vector<1x1x128xi1>, vector<1x1x128xf32>
      %74 = vector.broadcast %58 : f32 to vector<1x1x128xf32>
      %75 = arith.select %68, %74, %73 : vector<1x1x128xi1>, vector<1x1x128xf32>
      %c0_35 = arith.constant 0 : index
      %c0_36 = arith.constant 0 : index
      %c0_37 = arith.constant 0 : index
      %76 = vector.load %arg4[%c0_35, %c0_36, %c0_37] : memref<1x1x128xf32, #tpu.memory_space<vmem>>, vector<1x1x128xf32>
      tpu.vector_store %arg4[%c0_35, %c0_36, %c0_37], %75 {strides = array<i32>} : memref<1x1x128xf32, #tpu.memory_space<vmem>>, vector<1x1x128xf32>,
    } else {
    }
    return
  }
  func.func @transform_0(%arg0: i32, %arg1: i32) -> (i32, i32) {
    %c0_i32 = arith.constant 0 : i32
    return %arg0, %arg1 : i32, i32
  }
  func.func @transform_1(%arg0: i32, %arg1: i32) -> (i32, i32) {
    %c0_i32 = arith.constant 0 : i32
    %c0_i32_0 = arith.constant 0 : i32
    return %arg0, %c0_i32 : i32, i32
  }
  func.func @transform_2(%arg0: i32, %arg1: i32) -> (i32, i32, i32) {
    %c0_i32 = arith.constant 0 : i32
    %c0_i32_0 = arith.constant 0 : i32
    %c0_i32_1 = arith.constant 0 : i32
    return %arg0, %c0_i32, %c0_i32_0 : i32, i32, i32
  }
}

</mosaic_0001>

<llo_original>
// kernel: tpu_custom_call.1
$region0: #{tpu_custom_call.1}
  #allocation0 [shape = 'u32[]', space=smem, size = 0x4, offset = 0x4, fixed_abs, tag = 'smem constant byte address 0x4 - core index']
  #allocation1 [shape = 'u32[144,128]{1,0:T(1,128)}', space=vmem, size = 0x12000, scoped, tag = 'internal scratch']
  #allocation2 [shape = 'f32[16,1]{1,0:T(8,128)}', space=vmem, size = 0x2000, scoped, tag = 'scratch operand']
  #allocation3 [shape = 'f32[16,1]{1,0:T(8,128)}', space=vmem, size = 0x2000, scoped, tag = 'scratch operand']
  #allocation4 [shape = 'f32[16,1]{1,0:T(8,128)}', space=vmem, size = 0x2000, scoped, tag = 'scratch operand']
  %s0 = inlined_call_operand.hbm [shape: f32[16,256], index: 0, kind: input, shape index: {}]
  %s1 = inlined_call_operand.vmem [shape: s32[16,1], index: 1, kind: input, shape index: {}]
  %s2 = inlined_call_operand.hbm [shape: f32[1,1,128], index: 2, kind: output, shape index: {}]
  %s3 = sld [smem:[#allocation0]]
  $region30: #{tpu_custom_call.1} parent=0
    _
  %s5 = ssub.s32 1, %s3
  %s6 = scalar_select 0, %s5, %s3
  $region1: #{tpu_custom_call.1} parent=0
    #allocation5 [shape = 'u8[16384]{0}', space=vmem, size = 0x4000, scoped, tag = 'input window, operand 0, single buffered']
    #allocation6 [shape = 's32[1]{0}', space=sflag, size = 0x4, scoped, tag = 'scoped memory for tpu_custom_call.1']
    #allocation7 [shape = 's32[1]{0}', space=sflag, size = 0x4, scoped, tag = 'scoped memory for tpu_custom_call.1']
    #allocation8 [shape = 'u8[512]{0}', space=vmem, size = 0x400, scoped, tag = 'output window, operand 0, single buffered']
    %7 = vsyncpa [#allocation6], 0
    %8 = vsyncpa [#allocation7], 0
    // Predicated region
    $region2: #{tpu_custom_call.1} parent=1 // pred_check
      _
    $region3: #{tpu_custom_call.1} parent=1 // pred_check_branch
      %10 = sbr.rel (0) target = $region5
    $region4: #{tpu_custom_call.1} parent=1 // pred_region
      %s12 = ssub.s32 512, 512
      %13 = vsyncadd [#allocation6], %s12
      %s14 = sshll.u32 [#allocation5], 4
      %s15 = int_to_ptr.vmem [resolvable:$true] %s14
      %20 = dma.hbm_to_vmem [thread:$0]  %s0, 512, %s15, [#allocation6], 256, 256, 16
    $region5: #{tpu_custom_call.1} parent=1 // pred_fallthru
      _
    // Predicated region
    $region6: #{tpu_custom_call.1} parent=1 // pred_check
      _
    $region7: #{tpu_custom_call.1} parent=1 // pred_check_branch
      %22 = sbr.rel (0) target = $region9
    $region8: #{tpu_custom_call.1} parent=1 // pred_region
      _
    $region9: #{tpu_custom_call.1} parent=1 // pred_fallthru
      _
    // Predicated region
    $region10: #{tpu_custom_call.1} parent=1 // pred_check
      _
    $region11: #{tpu_custom_call.1} parent=1 // pred_check_branch
      %24 = sbr.rel (0) target = $region13
    $region12: #{tpu_custom_call.1} parent=1 // pred_region
      %25 = dma.done [#allocation6], 512
    $region13: #{tpu_custom_call.1} parent=1 // pred_fallthru
      _
    %p26 = scmp.eq.s32.totalorder 0, 0
    // Predicated region
    $region14: #{tpu_custom_call.1} parent=1 // pred_check
      %p27 = pneg %p26
    $region15: #{tpu_custom_call.1} parent=1 // pred_check_branch
      %29 = sbr.rel (%p27) target = $region17
    $region16: #{tpu_custom_call.1} parent=1 // pred_region
      %vm30 = vcmask 7168
      %31 = vst.msk [vmem:[#allocation2] sm:$0xff] %vm30, -inf
      %32 = vst.msk [vmem:[#allocation2 + $0x8] sm:$0xff] %vm30, -inf
      %33 = vst.msk [vmem:[#allocation3] sm:$0xff] %vm30, 0.0
      %34 = vst.msk [vmem:[#allocation3 + $0x8] sm:$0xff] %vm30, 0.0
      %35 = vst.msk [vmem:[#allocation4] sm:$0xff] %vm30, 0.0
      %36 = vst.msk [vmem:[#allocation4 + $0x8] sm:$0xff] %vm30, 0.0
    $region17: #{tpu_custom_call.1} parent=1 // pred_fallthru
      _
    %v37 = vld [vmem:[#allocation5] sm:$0xff]
    %v38 = vld [vmem:[#allocation5 + $0x8] sm:$0xff]
    %v39 = vld [vmem:[#allocation5 + $0x10] sm:$0xff]
    %v40 = vld [vmem:[#allocation5 + $0x18] sm:$0xff]
    %v41 = vld [vmem:[%s1] sm:$0xff]
    %v42 = vld [vmem:[%s1 + $0x8] sm:$0xff]
    %s43 = smul.u32 0, 256
    %v44 = vlaneseq
    %v45 = vand.u32 %v44, 127
    %v46 = vadd.s32 %v45, 128
    %v47 = vstv %s43
    %v48 = vadd.s32 %v47, %v45
    %v49 = vadd.s32 %v47, %v46
    %v50 = vmax.f32 %v37, %v38
    %51 = vmax.xlane.f32.xlu0 %v50
    %v52 = vpop.xlane.xlu0 %51
    %v53 = vmax.f32 %v39, %v40
    %54 = vmax.xlane.f32.xlu0 %v53
    %v55 = vpop.xlane.xlu0 %54
    %56 = vset.pattern.permute.xlu0 0
    %57 = vperm.xlu0 %56, %v41
    %v58 = vpop.permute.xlu0 %57
    %59 = vset.pattern.permute.xlu0 0
    %60 = vperm.xlu0 %59, %v42
    %v61 = vpop.permute.xlu0 %60
    %vm62 = vcmp.eq.s32.totalorder %v48, %v58
    %vm63 = vcmp.eq.s32.totalorder %v49, %v58
    %vm64 = vcmp.eq.s32.totalorder %v48, %v61
    %vm65 = vcmp.eq.s32.totalorder %v49, %v61
    %v66 = vsel %vm62, %v37, 0.0
    %v67 = vsel %vm63, %v38, 0.0
    %v68 = vsel %vm64, %v39, 0.0
    %v69 = vsel %vm65, %v40, 0.0
    %v70 = vadd.f32 %v66, %v67
    %71 = vadd.xlane.f32.xlu0 %v70
    %v72 = vpop.xlane.xlu0 %71
    %v73 = vadd.f32 %v68, %v69
    %74 = vadd.xlane.f32.xlu0 %v73
    %v75 = vpop.xlane.xlu0 %74
    %v76 = vld [vmem:[#allocation2] sm:$0xff]
    %v77 = vld [vmem:[#allocation2 + $0x8] sm:$0xff]
    %v78 = vmax.f32 %v76, %v52
    %v79 = vmax.f32 %v77, %v55
    %81 = vset.pattern.permute.xlu0 0
    %82 = vperm.xlu0 %81, %v78
    %v83 = vpop.permute.xlu0 %82
    %86 = vset.pattern.permute.xlu0 0
    %87 = vperm.xlu0 %86, %v79
    %v88 = vpop.permute.xlu0 %87
    %v90 = vsub.f32 %v37, %v83
    %v91 = vsub.f32 %v38, %v83
    %v92 = vsub.f32 %v39, %v88
    %v93 = vsub.f32 %v40, %v88
    %v94 = vmul.f32 %v90, 1.442695
    %v95 = vpow.pop %v94
    %v96 = vmul.f32 %v91, 1.442695
    %v97 = vpow.pop %v96
    %v98 = vmul.f32 %v92, 1.442695
    %v99 = vpow.pop %v98
    %v100 = vmul.f32 %v93, 1.442695
    %v101 = vpow.pop %v100
    %v102 = vadd.f32 %v95, %v97
    %103 = vadd.xlane.f32.xlu0 %v102
    %v104 = vpop.xlane.xlu0 %103
    %v105 = vadd.f32 %v99, %v101
    %106 = vadd.xlane.f32.xlu0 %v105
    %v107 = vpop.xlane.xlu0 %106
    %v108 = vsub.f32 %v76, %v78
    %v109 = vsub.f32 %v77, %v79
    %v110 = vmul.f32 %v108, 1.442695
    %v111 = vpow.pop %v110
    %v112 = vmul.f32 %v109, 1.442695
    %v113 = vpow.pop %v112
    %v114 = vld [vmem:[#allocation3] sm:$0xff]
    %v115 = vld [vmem:[#allocation3 + $0x8] sm:$0xff]
    %v116 = vmul.f32 %v111, %v114
    %v117 = vmul.f32 %v113, %v115
    %v118 = vadd.f32 %v116, %v104
    %v119 = vadd.f32 %v117, %v107
    %vm120 = vcmask 7168
    %121 = vst.msk [vmem:[#allocation3] sm:$0xff] %vm120, %v118
    %122 = vst.msk [vmem:[#allocation3 + $0x8] sm:$0xff] %vm120, %v119
    %v123 = vld [vmem:[#allocation4] sm:$0xff]
    %v124 = vld [vmem:[#allocation4 + $0x8] sm:$0xff]
    %v125 = vadd.f32 %v123, %v72
    %v126 = vadd.f32 %v124, %v75
    %127 = vst.msk [vmem:[#allocation4] sm:$0xff] %vm120, %v125
    %128 = vst.msk [vmem:[#allocation4 + $0x8] sm:$0xff] %vm120, %v126
    %129 = vst.msk [vmem:[#allocation2] sm:$0xff] %vm120, %v78
    %130 = vst.msk [vmem:[#allocation2 + $0x8] sm:$0xff] %vm120, %v79
    // Predicated region
    $region18: #{tpu_custom_call.1} parent=1 // pred_check
      %p131 = pneg %p26
    $region19: #{tpu_custom_call.1} parent=1 // pred_check_branch
      %133 = sbr.rel (%p131) target = $region21
    $region20: #{tpu_custom_call.1} parent=1 // pred_region
      %v134 = vld [vmem:[#allocation2] sm:$0xff]
      %v135 = vld [vmem:[#allocation2 + $0x8] sm:$0xff]
      %v136 = vld [vmem:[#allocation3] sm:$0xff]
      %v137 = vld [vmem:[#allocation3 + $0x8] sm:$0xff]
      %v138 = vlog2.pop %v136
      %v139 = vmul.f32 %v138, 0.6931472
      %v140 = vlog2.pop %v137
      %v141 = vmul.f32 %v140, 0.6931472
      %v142 = vadd.f32 %v134, %v139
      %v143 = vadd.f32 %v135, %v141
      %v144 = vld [vmem:[#allocation4] sm:$0xff]
      %v145 = vld [vmem:[#allocation4 + $0x8] sm:$0xff]
      %v146 = vsub.f32 %v142, %v144
      %v147 = vsub.f32 %v143, %v145
      %s148 = smul.u32 0, 16
      %v149 = vlaneseq
      %v150 = vshrl.u32 %v149, 7
      %v151 = vadd.s32 %v150, 8
      %v152 = vstv %s148
      %v153 = vadd.s32 %v152, %v150
      %v154 = vadd.s32 %v152, %v151
      %vm155 = vcmp.ne.s32.totalorder %v41, 4294967196
      %vm156 = vcmp.ne.s32.totalorder %v42, 4294967196
      %vm157 = vcmp.lt.s32.totalorder %v153, 16
      %vm158 = vcmp.lt.s32.totalorder %v154, 16
      %vm159 = vmand %vm155, %vm157
      %vm160 = vmand %vm156, %vm158
      %v161 = vsel %vm159, %v146, 0.0
      %v162 = vsel %vm160, %v147, 0.0
      %v163 = vsel %vm120, %v161, 0.0
      %v164 = vsel %vm120, %v162, 0.0
      %v165 = vadd.f32 %v163, %v164
      %166 = vadd.xlane.f32.xlu0 %v165
      %v167 = vpop.xlane.xlu0 %166
      %v168 = vrot.slane %v167, 4
      %v169 = vadd.f32 %v167, %v168
      %v170 = vrot.slane %v169, 2
      %v171 = vadd.f32 %v169, %v170
      %v172 = vrot.slane %v171, 1
      %v173 = vadd.f32 %v171, %v172
      %s174 = vtos %v173
      %v175 = vsel %vm159, 1.0, 0.0
      %v176 = vsel %vm160, 1.0, 0.0
      %v177 = vsel %vm120, %v175, 0.0
      %v178 = vsel %vm120, %v176, 0.0
      %v179 = vadd.f32 %v177, %v178
      %180 = vadd.xlane.f32.xlu0 %v179
      %v181 = vpop.xlane.xlu0 %180
      %v182 = vrot.slane %v181, 4
      %v183 = vadd.f32 %v181, %v182
      %v184 = vrot.slane %v183, 2
      %v185 = vadd.f32 %v183, %v184
      %v186 = vrot.slane %v185, 1
      %v187 = vadd.f32 %v185, %v186
      %s188 = vtos %v187
      %vm189 = vcmp.eq.s32.totalorder %v45, 0
      %vm190 = vcmp.eq.s32.totalorder %v45, 1
      %v191 = vstv %s188
      %v192 = vsel %vm190, %v191, 0.0
      %v193 = vstv %s174
      %v194 = vsel %vm189, %v193, %v192
      %195 = vst [vmem:[#allocation8] sm:$0x1] %v194
    $region21: #{tpu_custom_call.1} parent=1 // pred_fallthru
      _
    // Predicated region
    $region22: #{tpu_custom_call.1} parent=1 // pred_check
      _
    $region23: #{tpu_custom_call.1} parent=1 // pred_check_branch
      %197 = sbr.rel (0) target = $region25
    $region24: #{tpu_custom_call.1} parent=1 // pred_region
      %s199 = ssub.s32 16, 16
      %200 = vsyncadd [#allocation7], %s199
      %s202 = sshll.u32 [#allocation8], 4
      %s203 = int_to_ptr.vmem [resolvable:$true] %s202
      %205 = dma.vmem_to_hbm [thread:$0]  %s203, 16, %s2, [#allocation7]
    $region25: #{tpu_custom_call.1} parent=1 // pred_fallthru
      _
    // Predicated region
    $region26: #{tpu_custom_call.1} parent=1 // pred_check
      _
    $region27: #{tpu_custom_call.1} parent=1 // pred_check_branch
      %207 = sbr.rel (0) target = $region29
    $region28: #{tpu_custom_call.1} parent=1 // pred_region
      %208 = dma.done [#allocation7], 16
    $region29: #{tpu_custom_call.1} parent=1 // pred_fallthru
      _
    %209 = vsyncpa [#allocation6], 1
    %210 = vsyncpa [#allocation7], 1

</llo_original>
